<compile_context>
chip_gen: v5e
topology: v5e:2x2
jax: 0.10.0
libtpu: 0.0.40
codegen_flags: <defaults>
</compile_context>

<pallas_src>
import jax
import jax.numpy as jnp
from jax import lax
from jax.experimental import pallas as pl
from jax.experimental.pallas import tpu as pltpu

# --- config (mirrors the_config()) ---
N_EMBD = 32
N_HEAD = 4
HEAD_SIZE = N_EMBD // N_HEAD      # 8
BLOCK_SIZE = 8                    # max sequence length (tril buffer size)

# Set to jnp.bfloat16 on v6e/v7x for higher MXU throughput; f32 accumulation is
# kept via preferred_element_type either way.
MATMUL_DTYPE = jnp.float32


def attention_head_kernel(x_ref, wqkv_ref, o_ref):
    """One causal self-attention head over a (Bt, T, C) batch tile."""
    Bt, T, C = x_ref.shape
    hs = o_ref.shape[-1]

    # Merge (Bt, T) into the sublane axis: one tall (Bt*T, C) @ (C, 3*hs)
    # MXU matmul for the fused Q/K/V projection.
    x = x_ref[...].reshape(Bt * T, C)
    qkv = jnp.dot(x.astype(MATMUL_DTYPE), wqkv_ref[...].astype(MATMUL_DTYPE),
                  preferred_element_type=jnp.float32)            # (Bt*T, 3*hs)

    q = qkv[:, 0 * hs:1 * hs].reshape(Bt, T, hs)
    k = qkv[:, 1 * hs:2 * hs].reshape(Bt, T, hs)
    v = qkv[:, 2 * hs:3 * hs].reshape(Bt, T, hs)

    # NOTE: the PyTorch module scales by C**-0.5 with C = n_embd (NOT head_size).
    scale = jnp.float32(C ** (-0.5))
    s = jnp.einsum("btd,bsd->bts", q, k,
                   preferred_element_type=jnp.float32) * scale   # (Bt, T, T)

    rows = lax.broadcasted_iota(jnp.int32, (T, T), 0)
    cols = lax.broadcasted_iota(jnp.int32, (T, T), 1)
    causal = (cols <= rows)[None, :, :]
    s = jnp.where(causal, s, -jnp.inf)

    # numerically-stable softmax; reciprocal goes to the EUP slot.
    s = s - jnp.max(s, axis=-1, keepdims=True)
    p = jnp.exp(s)
    p = p * pl.reciprocal(jnp.sum(p, axis=-1, keepdims=True), approx=True)
    # attention-weight dropout: identity (eval-mode semantics)
    # TODO(synk): train-mode dropout (pltpu.prng_*) not implemented.

    out = jnp.einsum("bts,bsd->btd",
                     p.astype(MATMUL_DTYPE), v.astype(MATMUL_DTYPE),
                     preferred_element_type=jnp.float32)         # (Bt, T, hs)
    o_ref[...] = out.astype(o_ref.dtype)


def self_attention_head(x, wq, wk, wv, *, batch_tile=None):
    """x: (B, T, C); wq/wk/wv: (C, head_size) -> (B, T, head_size)."""
    B, T, C = x.shape
    hs = wq.shape[1]

    # Fused QKV weight: one (C, 3*hs) matmul instead of three (C, hs) ones.
    wqkv = jnp.concatenate([wq, wk, wv], axis=1)

    # Many batch elements per grid step; clamp for VMEM (a 512x8x32 f32 tile is
    # only 512 KiB, well inside even v7x's 64 MiB VMEM with double-buffering).
    if batch_tile is None:
        batch_tile = 512
    batch_tile = min(batch_tile, B)
    grid = (pl.cdiv(B, batch_tile),)

    return pl.pallas_call(
        attention_head_kernel,
        out_shape=jax.ShapeDtypeStruct((B, T, hs), x.dtype),
        grid_spec=pltpu.PrefetchScalarGridSpec(
            num_scalar_prefetch=0,
            grid=grid,
            in_specs=[
                pl.BlockSpec((batch_tile, T, C), lambda b: (b, 0, 0)),
                pl.BlockSpec((C, 3 * hs), lambda b: (0, 0)),
            ],
            out_specs=pl.BlockSpec((batch_tile, T, hs), lambda b: (b, 0, 0)),
        ),
        compiler_params=pltpu.CompilerParams(
            # Independent batch tiles: megacore-shardable on v7x, neutral elsewhere.
            dimension_semantics=("parallel",),
        ),
    )(x, wqkv)


# ---------------- pure-JAX reference (for correctness check) ----------------
def reference_head(x, wq, wk, wv):
    B, T, C = x.shape
    q = x @ wq
    k = x @ wk
    v = x @ wv
    s = jnp.einsum("btd,bsd->bts", q, k) * (C ** (-0.5))
    mask = jnp.tril(jnp.ones((T, T), bool))
    s = jnp.where(mask, s, -jnp.inf)
    w = jax.nn.softmax(s, axis=-1)
    return jnp.einsum("bts,bsd->btd", w, v)


if __name__ == "__main__":
    key = jax.random.PRNGKey(0)
    kx, kq, kk, kv, kx2 = jax.random.split(key, 5)
    B, T = 2, BLOCK_SIZE
    x = jax.random.normal(kx, (B, T, N_EMBD), jnp.float32)
    s = 0.02
    wq = s * jax.random.normal(kq, (N_EMBD, HEAD_SIZE), jnp.float32)
    wk = s * jax.random.normal(kk, (N_EMBD, HEAD_SIZE), jnp.float32)
    wv = s * jax.random.normal(kv, (N_EMBD, HEAD_SIZE), jnp.float32)

    # Small case (single grid step covers the whole batch).
    out = jax.block_until_ready(self_attention_head(x, wq, wk, wv))
    ref = reference_head(x, wq, wk, wv)
    assert out.shape == (B, T, HEAD_SIZE)
    assert jnp.allclose(out, ref, atol=1e-3, rtol=1e-3), (
        f"max abs err {jnp.max(jnp.abs(out - ref))}")

    # Exercise the multi-step batch-tiled grid path.
    B2 = 64
    x2 = jax.random.normal(kx2, (B2, T, N_EMBD), jnp.float32)
    out2 = jax.block_until_ready(
        self_attention_head(x2, wq, wk, wv, batch_tile=16))
    ref2 = reference_head(x2, wq, wk, wv)
    assert jnp.allclose(out2, ref2, atol=1e-3, rtol=1e-3), (
        f"max abs err {jnp.max(jnp.abs(out2 - ref2))}")

    print("KERNEL_OK")
</pallas_src>

<mosaic_0001>
module attributes {stable_mosaic.version = 11 : i64} {
  func.func @attention_head_kernel(%arg0: i32, %arg1: memref<2x8x32xf32, #tpu.memory_space<vmem>>, %arg2: memref<32x24xf32, #tpu.memory_space<vmem>>, %arg3: memref<2x8x8xf32, #tpu.memory_space<vmem>>) attributes {dimension_semantics = [#tpu.dimension_semantics<parallel>], iteration_bounds = array<i64: 1>, scalar_prefetch = 0 : i64, scratch_operands = 0 : i64, tpu.core_type = #tpu.core_type<tc>, window_params = [{transform_indices = @transform_0, window_bounds = array<i64: 2, 8, 32>}, {pipeline_mode = #tpu.pipeline_mode<synchronous>, transform_indices = @transform_1, window_bounds = array<i64: 32, 24>}, {transform_indices = @transform_2, window_bounds = array<i64: 2, 8, 8>}]} {
    %c0 = arith.constant 0 : index
    %c0_0 = arith.constant 0 : index
    %c0_1 = arith.constant 0 : index
    %0 = vector.load %arg1[%c0, %c0_0, %c0_1] : memref<2x8x32xf32, #tpu.memory_space<vmem>>, vector<2x8x32xf32>
    %1 = vector.shape_cast %0 : vector<2x8x32xf32> to vector<16x32xf32>
    %c0_2 = arith.constant 0 : index
    %c0_3 = arith.constant 0 : index
    %2 = vector.load %arg2[%c0_2, %c0_3] : memref<32x24xf32, #tpu.memory_space<vmem>>, vector<32x24xf32>
    %cst = arith.constant dense<0.000000e+00> : vector<16x24xf32>
    %3 = tpu.matmul %1, %2, %cst {dimension_numbers = #tpu.dot_dimension_numbers<[1], [0], [0], [1], [0, 0, 1, 1], [], []>} : vector<16x32xf32>, vector<32x24xf32>, vector<16x24xf32> -> vector<16x24xf32>
    %4 = vector.extract_strided_slice %3 {offsets = [0, 0], sizes = [16, 8], strides = [1, 1]} : vector<16x24xf32> to vector<16x8xf32>
    %5 = vector.shape_cast %4 : vector<16x8xf32> to vector<2x8x8xf32>
    %6 = vector.extract_strided_slice %3 {offsets = [0, 8], sizes = [16, 8], strides = [1, 1]} : vector<16x24xf32> to vector<16x8xf32>
    %7 = vector.shape_cast %6 : vector<16x8xf32> to vector<2x8x8xf32>
    %8 = vector.extract_strided_slice %3 {offsets = [0, 16], sizes = [16, 8], strides = [1, 1]} : vector<16x24xf32> to vector<16x8xf32>
    %9 = vector.shape_cast %8 : vector<16x8xf32> to vector<2x8x8xf32>
    "tpu.trace_start"() <{level = 10 : i32, message = "btd,bsd->bts"}> : () -> ()
    %cst_4 = arith.constant dense<0.000000e+00> : vector<2x8x8xf32>
    %10 = tpu.matmul %5, %7, %cst_4 {dimension_numbers = #tpu.dot_dimension_numbers<[2], [2], [1], [1], [0, 0, 0, 1, 1, 1], [0], [0]>} : vector<2x8x8xf32>, vector<2x8x8xf32>, vector<2x8x8xf32> -> vector<2x8x8xf32>
    "tpu.trace_stop"() : () -> ()
    %cst_5 = arith.constant 0.176776692 : f32
    %11 = vector.broadcast %cst_5 : f32 to vector<2x8x8xf32>
    %12 = arith.mulf %10, %11 : vector<2x8x8xf32>
    %13 = tpu.iota {dimensions = array<i32: 0>} : vector<8x8xi32>
    %14 = tpu.iota {dimensions = array<i32: 1>} : vector<8x8xi32>
    %15 = arith.cmpi sle, %14, %13 : vector<8x8xi32>
    %16 = vector.shape_cast %15 : vector<8x8xi1> to vector<1x8x8xi1>
    %cst_6 = arith.constant 0xFF800000 : f32
    %17 = vector.shape_cast %16 : vector<1x8x8xi1> to vector<1x8x8xi1>
    %18 = vector.broadcast %17 : vector<1x8x8xi1> to vector<2x8x8xi1>
    %19 = vector.broadcast %cst_6 : f32 to vector<2x8x8xf32>
    %20 = arith.select %18, %12, %19 : vector<2x8x8xi1>, vector<2x8x8xf32>
    %cst_7 = arith.constant dense<0xFF800000> : vector<2x8xf32>
    %21 = vector.multi_reduction <maximumf>, %20, %cst_7 [2] : vector<2x8x8xf32> to vector<2x8xf32>
    %22 = vector.shape_cast %21 : vector<2x8xf32> to vector<2x8x1xf32>
    %23 = vector.broadcast %22 : vector<2x8x1xf32> to vector<2x8x8xf32>
    %24 = arith.subf %20, %23 : vector<2x8x8xf32>
    %25 = math.exp %24 : vector<2x8x8xf32>
    %cst_8 = arith.constant dense<0.000000e+00> : vector<2x8xf32>
    %26 = vector.multi_reduction <add>, %25, %cst_8 [2] : vector<2x8x8xf32> to vector<2x8xf32>
    %27 = vector.shape_cast %26 : vector<2x8xf32> to vector<2x8x1xf32>
    %28 = tpu.reciprocal %27 {approx = true} : vector<2x8x1xf32> -> vector<2x8x1xf32>
    %29 = vector.broadcast %28 : vector<2x8x1xf32> to vector<2x8x8xf32>
    %30 = arith.mulf %25, %29 : vector<2x8x8xf32>
    "tpu.trace_start"() <{level = 10 : i32, message = "bts,bsd->btd"}> : () -> ()
    %cst_9 = arith.constant dense<0.000000e+00> : vector<2x8x8xf32>
    %31 = tpu.matmul %30, %9, %cst_9 {dimension_numbers = #tpu.dot_dimension_numbers<[2], [1], [1], [2], [0, 0, 0, 1, 1, 2], [0], [0]>} : vector<2x8x8xf32>, vector<2x8x8xf32>, vector<2x8x8xf32> -> vector<2x8x8xf32>
    "tpu.trace_stop"() : () -> ()
    %c0_10 = arith.constant 0 : index
    %c0_11 = arith.constant 0 : index
    %c0_12 = arith.constant 0 : index
    %32 = vector.load %arg3[%c0_10, %c0_11, %c0_12] : memref<2x8x8xf32, #tpu.memory_space<vmem>>, vector<2x8x8xf32>
    tpu.vector_store %arg3[%c0_10, %c0_11, %c0_12], %31 {strides = array<i32>} : memref<2x8x8xf32, #tpu.memory_space<vmem>>, vector<2x8x8xf32>,
    return
  }
  func.func @transform_0(%arg0: i32) -> (i32, i32, i32) {
    %c0_i32 = arith.constant 0 : i32
    %c0_i32_0 = arith.constant 0 : i32
    %c0_i32_1 = arith.constant 0 : i32
    return %arg0, %c0_i32, %c0_i32_0 : i32, i32, i32
  }
  func.func @transform_1(%arg0: i32) -> (i32, i32) {
    %c0_i32 = arith.constant 0 : i32
    %c0_i32_0 = arith.constant 0 : i32
    %c0_i32_1 = arith.constant 0 : i32
    return %c0_i32, %c0_i32_0 : i32, i32
  }
  func.func @transform_2(%arg0: i32) -> (i32, i32, i32) {
    %c0_i32 = arith.constant 0 : i32
    %c0_i32_0 = arith.constant 0 : i32
    %c0_i32_1 = arith.constant 0 : i32
    return %arg0, %c0_i32, %c0_i32_0 : i32, i32, i32
  }
}

</mosaic_0001>

<llo_original>
// kernel: tpu_custom_call.1
$region0: #{tpu_custom_call.1}
  #allocation0 [shape = 'u32[]', space=smem, size = 0x4, offset = 0x4, fixed_abs, tag = 'smem constant byte address 0x4 - core index']
  #allocation1 [shape = 'u32[72,128]{1,0:T(1,128)}', space=vmem, size = 0x9000, scoped, tag = 'internal scratch']
  %s0 = inlined_call_operand.vmem [shape: f32[2,8,32], index: 0, kind: input, shape index: {}]
  %s1 = inlined_call_operand.vmem [shape: f32[32,24], index: 1, kind: input, shape index: {}]
  %s2 = inlined_call_operand.hbm [shape: f32[2,8,8], index: 2, kind: output, shape index: {}]
  %s3 = sld [smem:[#allocation0]]
  $region18: #{tpu_custom_call.1} parent=0
    _
  %s5 = ssub.s32 1, %s3
  %s6 = scalar_select 0, %s5, %s3
  $region1: #{tpu_custom_call.1} parent=0
    #allocation2 [shape = 'u8[8192]{0}', space=vmem, size = 0x2000, scoped, tag = 'output window, operand 0, single buffered']
    #allocation3 [shape = 's32[1]{0}', space=sflag, size = 0x4, scoped, tag = 'scoped memory for tpu_custom_call.1']
    %7 = vsyncpa [#allocation3], 0
    // Predicated region
    $region2: #{tpu_custom_call.1} parent=1 // pred_check
      _
    $region3: #{tpu_custom_call.1} parent=1 // pred_check_branch
      %9 = sbr.rel (0) target = $region5
    $region4: #{tpu_custom_call.1} parent=1 // pred_region
      _
    $region5: #{tpu_custom_call.1} parent=1 // pred_fallthru
      _
    // Predicated region
    $region6: #{tpu_custom_call.1} parent=1 // pred_check
      _
    $region7: #{tpu_custom_call.1} parent=1 // pred_check_branch
      %11 = sbr.rel (0) target = $region9
    $region8: #{tpu_custom_call.1} parent=1 // pred_region
      _
    $region9: #{tpu_custom_call.1} parent=1 // pred_fallthru
      _
    %v12 = vld [vmem:[%s0] sm:$0xff]
    %v13 = vld [vmem:[%s0 + $0x8] sm:$0xff]
    %v14 = vld [vmem:[%s1] sm:$0xff]
    %v15 = vld [vmem:[%s1 + $0x8] sm:$0xff]
    %v16 = vld [vmem:[%s1 + $0x10] sm:$0xff]
    %v17 = vld [vmem:[%s1 + $0x18] sm:$0xff]
    %vm18 = vcmask 261120
    %v20 = vsel %vm18, %v12, 0
    %v23 = vsel %vm18, %v13, 0
    %25 = vmatpush.msra.mxu0 0.0
    %26 = vmatpush.msra.mxu0 0.0
    %27 = vmatpush.msra.mxu0 0.0
    %28 = vmatpush.msra.mxu0 0.0
    %29 = vmatpush.msra.mxu0 0.0
    %30 = vmatpush.msra.mxu0 0.0
    %31 = vmatpush.msra.mxu0 0.0
    %32 = vmatpush.msra.mxu0 0.0
    %33 = vmatpush.msra.mxu0 0.0
    %34 = vmatpush.msra.mxu0 0.0
    %35 = vmatpush.msra.mxu0 0.0
    %36 = vmatpush.msra.mxu0 0.0
    %37 = vmatpush.msra.mxu0 %v17
    %38 = vmatpush.msra.mxu0 %v16
    %39 = vmatpush.msra.mxu0 %v15
    %40 = vmatpush.msra.mxu0 %v14
    %41 = vmatmul.f32.gmra.mxu0 %v20
    %v42 = vpop.f32.mrf.mxu0
    %v43 = vadd.f32 0.0, %v42
    %44 = vmatmul.f32.gmra.mxu0 %v23
    %v45 = vpop.f32.mrf.mxu0
    %v46 = vadd.f32 0.0, %v45
    %47 = vdwg.mxu0
    %49 = vrot.lane.b32.xlu0 %v43, 120
    %v50 = vpop.permute.xlu0 %49
    %vm51 = vcmask 64512
    %v52 = vsel %vm51, %v43, 0
    %v54 = vsel %vm51, %v50, 0
    %56 = vmatpush.xpose.msra.mxu0 0.0
    %57 = vmatpush.xpose.msra.mxu0 0.0
    %58 = vmatpush.xpose.msra.mxu0 0.0
    %59 = vmatpush.xpose.msra.mxu0 0.0
    %60 = vmatpush.xpose.msra.mxu0 0.0
    %61 = vmatpush.xpose.msra.mxu0 0.0
    %62 = vmatpush.xpose.msra.mxu0 0.0
    %63 = vmatpush.xpose.msra.mxu0 0.0
    %64 = vmatpush.xpose.msra.mxu0 0.0
    %65 = vmatpush.xpose.msra.mxu0 0.0
    %66 = vmatpush.xpose.msra.mxu0 0.0
    %67 = vmatpush.xpose.msra.mxu0 0.0
    %68 = vmatpush.xpose.msra.mxu0 0.0
    %69 = vmatpush.xpose.msra.mxu0 0.0
    %70 = vmatpush.xpose.msra.mxu0 0.0
    %71 = vmatpush.xpose.msra.mxu0 %v54
    %72 = vmatmul.f32.gmra.mxu0 %v52
    %v73 = vpop.f32.mrf.mxu0
    %v74 = vadd.f32 0.0, %v73
    %75 = vdwg.mxu0
    %77 = vrot.lane.b32.xlu0 %v46, 120
    %v78 = vpop.permute.xlu0 %77
    %v79 = vsel %vm51, %v46, 0
    %v81 = vsel %vm51, %v78, 0
    %83 = vmatpush.xpose.msra.mxu0 0.0
    %84 = vmatpush.xpose.msra.mxu0 0.0
    %85 = vmatpush.xpose.msra.mxu0 0.0
    %86 = vmatpush.xpose.msra.mxu0 0.0
    %87 = vmatpush.xpose.msra.mxu0 0.0
    %88 = vmatpush.xpose.msra.mxu0 0.0
    %89 = vmatpush.xpose.msra.mxu0 0.0
    %90 = vmatpush.xpose.msra.mxu0 0.0
    %91 = vmatpush.xpose.msra.mxu0 0.0
    %92 = vmatpush.xpose.msra.mxu0 0.0
    %93 = vmatpush.xpose.msra.mxu0 0.0
    %94 = vmatpush.xpose.msra.mxu0 0.0
    %95 = vmatpush.xpose.msra.mxu0 0.0
    %96 = vmatpush.xpose.msra.mxu0 0.0
    %97 = vmatpush.xpose.msra.mxu0 0.0
    %98 = vmatpush.xpose.msra.mxu0 %v81
    %99 = vmatmul.f32.gmra.mxu0 %v79
    %v100 = vpop.f32.mrf.mxu0
    %v101 = vadd.f32 0.0, %v100
    %102 = vdwg.mxu0
    %v103 = vmul.f32 %v74, 0.17677669
    %v104 = vmul.f32 %v101, 0.17677669
    %v105 = vlaneseq
    %v106 = vshrl.u32 %v105, 7
    %v107 = vlaneseq
    %v108 = vand.u32 %v107, 127
    %vm109 = vcmp.le.s32.totalorder %v108, %v106
    %v110 = vsel %vm109, 1, 0
    %vm111 = vcmp.eq.s32.totalorder %v110, 1
    %v112 = vsel %vm111, %v103, -inf
    %v113 = vsel %vm111, %v104, -inf
    %v114 = vsel %vm51, %v112, -inf
    %115 = vmax.xlane.f32.xlu0 %v114
    %v116 = vpop.xlane.xlu0 %115
    %v117 = vsel %vm51, %v113, -inf
    %118 = vmax.xlane.f32.xlu0 %v117
    %v119 = vpop.xlane.xlu0 %118
    %v120 = vsub.f32 %v112, %v116
    %v121 = vsub.f32 %v113, %v119
    %v122 = vmul.f32 %v120, 1.442695
    %v123 = vpow.pop %v122
    %v124 = vmul.f32 %v121, 1.442695
    %v125 = vpow.pop %v124
    %v126 = vsel %vm51, %v123, 0.0
    %127 = vadd.xlane.f32.xlu0 %v126
    %v128 = vpop.xlane.xlu0 %127
    %v129 = vsel %vm51, %v125, 0.0
    %130 = vadd.xlane.f32.xlu0 %v129
    %v131 = vpop.xlane.xlu0 %130
    %v132 = vrcp.pop %v128
    %v133 = vrcp.pop %v131
    %v134 = vmul.f32 %v123, %v132
    %v135 = vmul.f32 %v125, %v133
    %136 = vrot.lane.b32.xlu0 %v43, 112
    %v137 = vpop.permute.xlu0 %136
    %v140 = vsel %vm51, %v134, 0
    %142 = vmatpush.msra.mxu0 0.0
    %143 = vmatpush.msra.mxu0 0.0
    %144 = vmatpush.msra.mxu0 0.0
    %145 = vmatpush.msra.mxu0 0.0
    %146 = vmatpush.msra.mxu0 0.0
    %147 = vmatpush.msra.mxu0 0.0
    %148 = vmatpush.msra.mxu0 0.0
    %149 = vmatpush.msra.mxu0 0.0
    %150 = vmatpush.msra.mxu0 0.0
    %151 = vmatpush.msra.mxu0 0.0
    %152 = vmatpush.msra.mxu0 0.0
    %153 = vmatpush.msra.mxu0 0.0
    %154 = vmatpush.msra.mxu0 0.0
    %155 = vmatpush.msra.mxu0 0.0
    %156 = vmatpush.msra.mxu0 0.0
    %157 = vmatpush.msra.mxu0 %v137
    %158 = vmatmul.f32.gmra.mxu0 %v140
    %v159 = vpop.f32.mrf.mxu0
    %v160 = vadd.f32 0.0, %v159
    %161 = vdwg.mxu0
    %162 = vrot.lane.b32.xlu0 %v46, 112
    %v163 = vpop.permute.xlu0 %162
    %v166 = vsel %vm51, %v135, 0
    %168 = vmatpush.msra.mxu0 0.0
    %169 = vmatpush.msra.mxu0 0.0
    %170 = vmatpush.msra.mxu0 0.0
    %171 = vmatpush.msra.mxu0 0.0
    %172 = vmatpush.msra.mxu0 0.0
    %173 = vmatpush.msra.mxu0 0.0
    %174 = vmatpush.msra.mxu0 0.0
    %175 = vmatpush.msra.mxu0 0.0
    %176 = vmatpush.msra.mxu0 0.0
    %177 = vmatpush.msra.mxu0 0.0
    %178 = vmatpush.msra.mxu0 0.0
    %179 = vmatpush.msra.mxu0 0.0
    %180 = vmatpush.msra.mxu0 0.0
    %181 = vmatpush.msra.mxu0 0.0
    %182 = vmatpush.msra.mxu0 0.0
    %183 = vmatpush.msra.mxu0 %v163
    %184 = vmatmul.f32.gmra.mxu0 %v166
    %v185 = vpop.f32.mrf.mxu0
    %v186 = vadd.f32 0.0, %v185
    %187 = vdwg.mxu0
    %188 = vst.msk [vmem:[#allocation2] sm:$0xff] %vm51, %v160
    %189 = vst.msk [vmem:[#allocation2 + $0x8] sm:$0xff] %vm51, %v186
    // Predicated region
    $region10: #{tpu_custom_call.1} parent=1 // pred_check
      _
    $region11: #{tpu_custom_call.1} parent=1 // pred_check_branch
      %191 = sbr.rel (0) target = $region13
    $region12: #{tpu_custom_call.1} parent=1 // pred_region
      %193 = vsyncadd [#allocation3], 0
      %s194 = sshll.u32 [#allocation2], 4
      %s195 = int_to_ptr.vmem [resolvable:$true] %s194
      %s196 = sshll.u32 %s2, 4
      %s197 = int_to_ptr.hbm [resolvable:$true] %s196
      %202 = dma.vmem_to_hbm [thread:$0]  %s195, 256, %s197, [#allocation3], 128, 128, 8
    $region13: #{tpu_custom_call.1} parent=1 // pred_fallthru
      _
    // Predicated region
    $region14: #{tpu_custom_call.1} parent=1 // pred_check
      _
    $region15: #{tpu_custom_call.1} parent=1 // pred_check_branch
      %204 = sbr.rel (0) target = $region17
    $region16: #{tpu_custom_call.1} parent=1 // pred_region
      %206 = dma.done [#allocation3], 256
    $region17: #{tpu_custom_call.1} parent=1 // pred_fallthru
      _
    %207 = vsyncpa [#allocation3], 1

</llo_original>
